<compile_context>
chip_gen: v5e
topology: v5e:2x2
jax: 0.10.0
libtpu: 0.0.40
codegen_flags: <defaults>
</compile_context>

<pallas_src>
import functools

import jax
import jax.numpy as jnp
from jax.experimental import pallas as pl
from jax.experimental.pallas import tpu as pltpu


# ------------------------------ Pallas kernel --------------------------------

def score_fn_kernel(x_ref, c_ref, a_ref, w_ref, o_ref, *, nf):
    """One batch tile of the full forward pass.

    x_ref : (TB, 2)        f32   input points
    c_ref : (TB, 1)        f32   noise level (already unsqueezed)
    a_ref : (16, nf*16)    f32   slab A: layer-1 weight rows + all biases
    w_ref : (nf*40, nf*8)  bf16  slab W: all MXU weights (zero padded)
    o_ref : (TB, 2)        f32   score output
    """
    f32, bf16 = jnp.float32, jnp.bfloat16
    D1, D2, D3 = nf * 16, nf * 8, nf * 4        # 512, 256, 128 for nf=32
    r_w3 = D1
    r_cw2 = D1 + D2
    r_cw3 = r_cw2 + D3
    r_wfx = r_cw3 + D3
    r_wfc = r_wfx + D3

    x = x_ref[...]                              # (TB, 2) f32
    c = c_ref[...]                              # (TB, 1) f32

    # ----- x branch -----------------------------------------------------
    # Linear(2, nf*16) as VPU outer products (a K=2 matmul wastes the MXU).
    h = x[:, 0:1] * a_ref[0:1, :] + x[:, 1:2] * a_ref[1:2, :] + a_ref[2:3, :]
    h = jnp.maximum(h, 0.0)                     # (TB, D1) f32

    # Linear(nf*16, nf*8) + ReLU   (bf16 operands, f32 accumulate)
    h = (jnp.dot(h.astype(bf16), w_ref[0:D1, 0:D2],
                 preferred_element_type=f32) + a_ref[3:4, 0:D2])
    h = jnp.maximum(h, 0.0)                     # (TB, D2)

    # Linear(nf*8, nf*4)
    h = (jnp.dot(h.astype(bf16), w_ref[r_w3:r_w3 + D2, 0:D3],
                 preferred_element_type=f32) + a_ref[4:5, 0:D3])   # (TB, D3)

    # ----- cond branch (lane-padded to D3; pads are exact zeros) ---------
    # Linear(1, nf*4) is an outer product -> VPU broadcast multiply-add.
    g = jnp.maximum(c * a_ref[5:6, 0:D3] + a_ref[6:7, 0:D3], 0.0)  # (TB, D3)

    g = (jnp.dot(g.astype(bf16), w_ref[r_cw2:r_cw2 + D3, 0:D3],
                 preferred_element_type=f32) + a_ref[7:8, 0:D3])
    g = jnp.maximum(g, 0.0)

    g = (jnp.dot(g.astype(bf16), w_ref[r_cw3:r_cw3 + D3, 0:D3],
                 preferred_element_type=f32) + a_ref[8:9, 0:D3])   # (TB, D3)

    # ----- final Linear(nf*5, 2):  cat(h, g) @ Wf + bf == h@Wfx + g@Wfc + bf
    out = (jnp.dot(h.astype(bf16), w_ref[r_wfx:r_wfx + D3, 0:D3],
                   preferred_element_type=f32)
           + jnp.dot(g.astype(bf16), w_ref[r_wfc:r_wfc + D3, 0:D3],
                     preferred_element_type=f32)
           + a_ref[9:10, 0:D3])                 # (TB, D3), lanes >= 2 are zero
    o_ref[...] = out[:, 0:2].astype(o_ref.dtype)


# ---------------------------- parameter packing -------------------------------

def _round_up(v, m):
    return (v + m - 1) // m * m


def pack_params(params, nf):
    """Pack the 15 PyTorch-Linear tensors into two VMEM-friendly slabs."""
    (w1, b1, w2, b2, w3, b3,
     cw1, cb1, cw2, cb2, cw3, cb3, wf, bf) = params
    D1, D2, D3 = nf * 16, nf * 8, nf * 4
    assert D3 % 128 == 0 and D1 % 16 == 0, "layout assumes nf % 32 == 0"

    def row(v):  # one (1, D1) lane-padded f32 row
        v = jnp.asarray(v, jnp.float32).reshape(1, -1)
        return jnp.pad(v, ((0, 0), (0, D1 - v.shape[1])))

    a_rows = [w1[0:1, :], w1[1:2, :], row(b1), row(b2), row(b3),
              row(cw1), row(cb1), row(cb2), row(cb3), row(bf)]
    a_slab = jnp.concatenate(a_rows, axis=0)
    a_slab = jnp.pad(a_slab, ((0, 16 - a_slab.shape[0]), (0, 0)))  # (16, D1) f32

    def blk(m, rows):  # zero-pad a weight block to (rows, D2)
        m = jnp.asarray(m, jnp.float32)
        return jnp.pad(m, ((0, rows - m.shape[0]), (0, D2 - m.shape[1])))

    w_slab = jnp.concatenate([
        blk(w2, D1),         # rows [0, D1)                 (D1, D2)
        blk(w3, D2),         # rows [D1, D1+D2)             (D2, D3 used)
        blk(cw2, D3),        # rows [D1+D2, +D3)            (D3, nf*2 used)
        blk(cw3, D3),        # rows [.., +D3)               (nf*2 x nf used)
        blk(wf[:D3], D3),    # rows [.., +D3)  final W, x half   (D3, 2 used)
        blk(wf[D3:], D3),    # rows [.., +D3)  final W, cond half (nf, 2 used)
    ], axis=0).astype(jnp.bfloat16)
    return a_slab, w_slab


# --------------------------------- wrapper ------------------------------------

def score_fn_forward(x, cond, params, nf, tb=512):
    """x: (B, 2) f32, cond: (B,) f32 -> (B, 2) f32."""
    B = x.shape[0]
    a_slab, w_slab = pack_params(params, nf)

    # Batch tiling: TB rows per grid step, batch padded to a multiple of TB.
    TB = min(tb, _round_up(B, 8))
    Bp = _round_up(B, TB)
    if Bp != B:
        x = jnp.pad(x, ((0, Bp - B), (0, 0)))
        cond = jnp.pad(cond, (0, Bp - B))
    cond2d = cond.reshape(Bp, 1)                 # torch.unsqueeze(cond, 1)

    out = pl.pallas_call(
        functools.partial(score_fn_kernel, nf=nf),
        out_shape=jax.ShapeDtypeStruct((Bp, 2), jnp.float32),
        grid=(Bp // TB,),
        in_specs=[
            pl.BlockSpec((TB, 2), lambda i: (i, 0)),        # x tile
            pl.BlockSpec((TB, 1), lambda i: (i, 0)),        # cond tile
            pl.BlockSpec(a_slab.shape, lambda i: (0, 0)),   # resident weights
            pl.BlockSpec(w_slab.shape, lambda i: (0, 0)),   # resident weights
        ],
        out_specs=pl.BlockSpec((TB, 2), lambda i: (i, 0)),
        compiler_params=pltpu.CompilerParams(
            dimension_semantics=("parallel",)),             # megacore on v7x
    )(x, cond2d, a_slab, w_slab)
    return out[:B]


# ---------------------------- parameter creation ------------------------------

def make_params(key, nf):
    """PyTorch-Linear-style init; weights stored transposed as (in, out)."""
    def linear(key, fan_in, fan_out):
        kw, kb = jax.random.split(key)
        bound = 1.0 / jnp.sqrt(jnp.float32(fan_in))
        w = jax.random.uniform(kw, (fan_in, fan_out), jnp.float32, -bound, bound)
        b = jax.random.uniform(kb, (fan_out,), jnp.float32, -bound, bound)
        return w, b

    keys = jax.random.split(key, 7)
    w1, b1 = linear(keys[0], 2, nf * 16)
    w2, b2 = linear(keys[1], nf * 16, nf * 8)
    w3, b3 = linear(keys[2], nf * 8, nf * 4)
    cw1, cb1 = linear(keys[3], 1, nf * 4)
    cw2, cb2 = linear(keys[4], nf * 4, nf * 2)
    cw3, cb3 = linear(keys[5], nf * 2, nf)
    wf, bf = linear(keys[6], nf * 5, 2)
    return (w1, b1, w2, b2, w3, b3,
            cw1, cb1, cw2, cb2, cw3, cb3, wf, bf)


# ------------------------------- pure-JAX refs --------------------------------

def reference_forward_f32(x, cond, params):
    (w1, b1, w2, b2, w3, b3,
     cw1, cb1, cw2, cb2, cw3, cb3, wf, bf) = params
    h = jnp.maximum(x @ w1 + b1, 0.0)
    h = jnp.maximum(h @ w2 + b2, 0.0)
    h = h @ w3 + b3
    c = cond.reshape(-1, 1)
    g = jnp.maximum(c @ cw1 + cb1, 0.0)
    g = jnp.maximum(g @ cw2 + cb2, 0.0)
    g = g @ cw3 + cb3
    return jnp.concatenate([h, g], axis=1) @ wf + bf


def reference_forward_bf16(x, cond, params, nf):
    """Mirrors the kernel's numerics (bf16 MXU operands, f32 accumulate)."""
    (w1, b1, w2, b2, w3, b3,
     cw1, cb1, cw2, cb2, cw3, cb3, wf, bf) = params
    f32, bf16 = jnp.float32, jnp.bfloat16
    D3 = nf * 4

    def mm(a, w):
        return jnp.dot(a.astype(bf16), w.astype(bf16), preferred_element_type=f32)

    h = jnp.maximum(x[:, 0:1] * w1[0:1, :] + x[:, 1:2] * w1[1:2, :] + b1, 0.0)
    h = jnp.maximum(mm(h, w2) + b2, 0.0)
    h = mm(h, w3) + b3
    c = cond.reshape(-1, 1)
    g = jnp.maximum(c * cw1 + cb1, 0.0)
    g = jnp.maximum(mm(g, cw2) + cb2, 0.0)
    g = mm(g, cw3) + cb3
    return mm(h, wf[:D3]) + mm(g, wf[D3:]) + bf


# ----------------------------------- main --------------------------------------

if __name__ == "__main__":
    nf = 32          # config.model.nf
    key = jax.random.PRNGKey(0)
    kx, kc, kp = jax.random.split(key, 3)
    params = make_params(kp, nf)

    fwd = jax.jit(score_fn_forward, static_argnames=("nf", "tb"))

    # Small batch (single tile).
    B = 8
    x = jax.random.normal(kx, (B, 2), jnp.float32)     # nn.Flatten() is a no-op
    cond = jax.random.normal(kc, (B,), jnp.float32)
    out = jax.block_until_ready(fwd(x, cond, params, nf=nf))
    assert out.shape == (B, 2)
    assert jnp.allclose(out, reference_forward_bf16(x, cond, params, nf),
                        atol=1e-2, rtol=1e-2)
    assert jnp.allclose(out, reference_forward_f32(x, cond, params),
                        atol=5e-2, rtol=5e-2)

    # Non-multiple-of-tile batch (exercises the batch grid + padding path).
    B2 = 600
    x2 = jax.random.normal(jax.random.fold_in(kx, 1), (B2, 2), jnp.float32)
    cond2 = jax.random.normal(jax.random.fold_in(kc, 1), (B2,), jnp.float32)
    out2 = jax.block_until_ready(fwd(x2, cond2, params, nf=nf))
    assert out2.shape == (B2, 2)
    assert jnp.allclose(out2, reference_forward_bf16(x2, cond2, params, nf),
                        atol=1e-2, rtol=1e-2)

    print("KERNEL_OK")
</pallas_src>

<mosaic_0001>
module attributes {stable_mosaic.version = 11 : i64} {
  func.func @score_fn_kernel(%arg0: i32, %arg1: memref<8x2xf32, #tpu.memory_space<vmem>>, %arg2: memref<8x1xf32, #tpu.memory_space<vmem>>, %arg3: memref<16x512xf32, #tpu.memory_space<vmem>>, %arg4: memref<1280x256xbf16, #tpu.memory_space<vmem>>, %arg5: memref<8x2xf32, #tpu.memory_space<vmem>>) attributes {dimension_semantics = [#tpu.dimension_semantics<parallel>], iteration_bounds = array<i64: 1>, scalar_prefetch = 0 : i64, scratch_operands = 0 : i64, tpu.core_type = #tpu.core_type<tc>, window_params = [{transform_indices = @transform_0, window_bounds = array<i64: 8, 2>}, {transform_indices = @transform_1, window_bounds = array<i64: 8, 1>}, {pipeline_mode = #tpu.pipeline_mode<synchronous>, transform_indices = @transform_2, window_bounds = array<i64: 16, 512>}, {pipeline_mode = #tpu.pipeline_mode<synchronous>, transform_indices = @transform_3, window_bounds = array<i64: 1280, 256>}, {transform_indices = @transform_4, window_bounds = array<i64: 8, 2>}]} {
    %c0 = arith.constant 0 : index
    %c0_0 = arith.constant 0 : index
    %0 = vector.load %arg1[%c0, %c0_0] : memref<8x2xf32, #tpu.memory_space<vmem>>, vector<8x2xf32>
    %c0_1 = arith.constant 0 : index
    %c0_2 = arith.constant 0 : index
    %1 = vector.load %arg2[%c0_1, %c0_2] : memref<8x1xf32, #tpu.memory_space<vmem>>, vector<8x1xf32>
    %2 = vector.extract_strided_slice %0 {offsets = [0, 0], sizes = [8, 1], strides = [1, 1]} : vector<8x2xf32> to vector<8x1xf32>
    %c0_3 = arith.constant 0 : index
    %c0_4 = arith.constant 0 : index
    %3 = vector.load %arg3[%c0_3, %c0_4] : memref<16x512xf32, #tpu.memory_space<vmem>>, vector<1x512xf32>
    %4 = vector.broadcast %2 : vector<8x1xf32> to vector<8x512xf32>
    %5 = vector.broadcast %3 : vector<1x512xf32> to vector<8x512xf32>
    %6 = arith.mulf %4, %5 : vector<8x512xf32>
    %7 = vector.extract_strided_slice %0 {offsets = [0, 1], sizes = [8, 1], strides = [1, 1]} : vector<8x2xf32> to vector<8x1xf32>
    %c1 = arith.constant 1 : index
    %c0_5 = arith.constant 0 : index
    %8 = vector.load %arg3[%c1, %c0_5] : memref<16x512xf32, #tpu.memory_space<vmem>>, vector<1x512xf32>
    %9 = vector.broadcast %7 : vector<8x1xf32> to vector<8x512xf32>
    %10 = vector.broadcast %8 : vector<1x512xf32> to vector<8x512xf32>
    %11 = arith.mulf %9, %10 : vector<8x512xf32>
    %12 = arith.addf %6, %11 : vector<8x512xf32>
    %c2 = arith.constant 2 : index
    %c0_6 = arith.constant 0 : index
    %13 = vector.load %arg3[%c2, %c0_6] : memref<16x512xf32, #tpu.memory_space<vmem>>, vector<1x512xf32>
    %14 = vector.broadcast %13 : vector<1x512xf32> to vector<8x512xf32>
    %15 = arith.addf %12, %14 : vector<8x512xf32>
    %cst = arith.constant 0.000000e+00 : f32
    %16 = vector.broadcast %cst : f32 to vector<8x512xf32>
    %17 = arith.maximumf %15, %16 : vector<8x512xf32>
    %18 = arith.truncf %17 : vector<8x512xf32> to vector<8x512xbf16>
    %c0_7 = arith.constant 0 : index
    %c0_8 = arith.constant 0 : index
    %19 = vector.load %arg4[%c0_7, %c0_8] : memref<1280x256xbf16, #tpu.memory_space<vmem>>, vector<512x256xbf16>
    %cst_9 = arith.constant dense<0.000000e+00> : vector<8x256xf32>
    %20 = tpu.matmul %18, %19, %cst_9 {dimension_numbers = #tpu.dot_dimension_numbers<[1], [0], [0], [1], [0, 0, 1, 1], [], []>} : vector<8x512xbf16>, vector<512x256xbf16>, vector<8x256xf32> -> vector<8x256xf32>
    %c3 = arith.constant 3 : index
    %c0_10 = arith.constant 0 : index
    %21 = vector.load %arg3[%c3, %c0_10] : memref<16x512xf32, #tpu.memory_space<vmem>>, vector<1x256xf32>
    %22 = vector.broadcast %21 : vector<1x256xf32> to vector<8x256xf32>
    %23 = arith.addf %20, %22 : vector<8x256xf32>
    %cst_11 = arith.constant 0.000000e+00 : f32
    %24 = vector.broadcast %cst_11 : f32 to vector<8x256xf32>
    %25 = arith.maximumf %23, %24 : vector<8x256xf32>
    %26 = arith.truncf %25 : vector<8x256xf32> to vector<8x256xbf16>
    %c512 = arith.constant 512 : index
    %c0_12 = arith.constant 0 : index
    %27 = vector.load %arg4[%c512, %c0_12] : memref<1280x256xbf16, #tpu.memory_space<vmem>>, vector<256x128xbf16>
    %cst_13 = arith.constant dense<0.000000e+00> : vector<8x128xf32>
    %28 = tpu.matmul %26, %27, %cst_13 {dimension_numbers = #tpu.dot_dimension_numbers<[1], [0], [0], [1], [0, 0, 1, 1], [], []>} : vector<8x256xbf16>, vector<256x128xbf16>, vector<8x128xf32> -> vector<8x128xf32>
    %c4 = arith.constant 4 : index
    %c0_14 = arith.constant 0 : index
    %29 = vector.load %arg3[%c4, %c0_14] : memref<16x512xf32, #tpu.memory_space<vmem>>, vector<1x128xf32>
    %30 = vector.broadcast %29 : vector<1x128xf32> to vector<8x128xf32>
    %31 = arith.addf %28, %30 : vector<8x128xf32>
    %c5 = arith.constant 5 : index
    %c0_15 = arith.constant 0 : index
    %32 = vector.load %arg3[%c5, %c0_15] : memref<16x512xf32, #tpu.memory_space<vmem>>, vector<1x128xf32>
    %33 = vector.broadcast %1 : vector<8x1xf32> to vector<8x128xf32>
    %34 = vector.broadcast %32 : vector<1x128xf32> to vector<8x128xf32>
    %35 = arith.mulf %33, %34 : vector<8x128xf32>
    %c6 = arith.constant 6 : index
    %c0_16 = arith.constant 0 : index
    %36 = vector.load %arg3[%c6, %c0_16] : memref<16x512xf32, #tpu.memory_space<vmem>>, vector<1x128xf32>
    %37 = vector.broadcast %36 : vector<1x128xf32> to vector<8x128xf32>
    %38 = arith.addf %35, %37 : vector<8x128xf32>
    %cst_17 = arith.constant 0.000000e+00 : f32
    %39 = vector.broadcast %cst_17 : f32 to vector<8x128xf32>
    %40 = arith.maximumf %38, %39 : vector<8x128xf32>
    %41 = arith.truncf %40 : vector<8x128xf32> to vector<8x128xbf16>
    %c768 = arith.constant 768 : index
    %c0_18 = arith.constant 0 : index
    %42 = vector.load %arg4[%c768, %c0_18] : memref<1280x256xbf16, #tpu.memory_space<vmem>>, vector<128x128xbf16>
    %cst_19 = arith.constant dense<0.000000e+00> : vector<8x128xf32>
    %43 = tpu.matmul %41, %42, %cst_19 {dimension_numbers = #tpu.dot_dimension_numbers<[1], [0], [0], [1], [0, 0, 1, 1], [], []>} : vector<8x128xbf16>, vector<128x128xbf16>, vector<8x128xf32> -> vector<8x128xf32>
    %c7 = arith.constant 7 : index
    %c0_20 = arith.constant 0 : index
    %44 = vector.load %arg3[%c7, %c0_20] : memref<16x512xf32, #tpu.memory_space<vmem>>, vector<1x128xf32>
    %45 = vector.broadcast %44 : vector<1x128xf32> to vector<8x128xf32>
    %46 = arith.addf %43, %45 : vector<8x128xf32>
    %cst_21 = arith.constant 0.000000e+00 : f32
    %47 = vector.broadcast %cst_21 : f32 to vector<8x128xf32>
    %48 = arith.maximumf %46, %47 : vector<8x128xf32>
    %49 = arith.truncf %48 : vector<8x128xf32> to vector<8x128xbf16>
    %c896 = arith.constant 896 : index
    %c0_22 = arith.constant 0 : index
    %50 = vector.load %arg4[%c896, %c0_22] : memref<1280x256xbf16, #tpu.memory_space<vmem>>, vector<128x128xbf16>
    %cst_23 = arith.constant dense<0.000000e+00> : vector<8x128xf32>
    %51 = tpu.matmul %49, %50, %cst_23 {dimension_numbers = #tpu.dot_dimension_numbers<[1], [0], [0], [1], [0, 0, 1, 1], [], []>} : vector<8x128xbf16>, vector<128x128xbf16>, vector<8x128xf32> -> vector<8x128xf32>
    %c8 = arith.constant 8 : index
    %c0_24 = arith.constant 0 : index
    %52 = vector.load %arg3[%c8, %c0_24] : memref<16x512xf32, #tpu.memory_space<vmem>>, vector<1x128xf32>
    %53 = vector.broadcast %52 : vector<1x128xf32> to vector<8x128xf32>
    %54 = arith.addf %51, %53 : vector<8x128xf32>
    %55 = arith.truncf %31 : vector<8x128xf32> to vector<8x128xbf16>
    %c1024 = arith.constant 1024 : index
    %c0_25 = arith.constant 0 : index
    %56 = vector.load %arg4[%c1024, %c0_25] : memref<1280x256xbf16, #tpu.memory_space<vmem>>, vector<128x128xbf16>
    %cst_26 = arith.constant dense<0.000000e+00> : vector<8x128xf32>
    %57 = tpu.matmul %55, %56, %cst_26 {dimension_numbers = #tpu.dot_dimension_numbers<[1], [0], [0], [1], [0, 0, 1, 1], [], []>} : vector<8x128xbf16>, vector<128x128xbf16>, vector<8x128xf32> -> vector<8x128xf32>
    %58 = arith.truncf %54 : vector<8x128xf32> to vector<8x128xbf16>
    %c1152 = arith.constant 1152 : index
    %c0_27 = arith.constant 0 : index
    %59 = vector.load %arg4[%c1152, %c0_27] : memref<1280x256xbf16, #tpu.memory_space<vmem>>, vector<128x128xbf16>
    %cst_28 = arith.constant dense<0.000000e+00> : vector<8x128xf32>
    %60 = tpu.matmul %58, %59, %cst_28 {dimension_numbers = #tpu.dot_dimension_numbers<[1], [0], [0], [1], [0, 0, 1, 1], [], []>} : vector<8x128xbf16>, vector<128x128xbf16>, vector<8x128xf32> -> vector<8x128xf32>
    %61 = arith.addf %57, %60 : vector<8x128xf32>
    %c9 = arith.constant 9 : index
    %c0_29 = arith.constant 0 : index
    %62 = vector.load %arg3[%c9, %c0_29] : memref<16x512xf32, #tpu.memory_space<vmem>>, vector<1x128xf32>
    %63 = vector.broadcast %62 : vector<1x128xf32> to vector<8x128xf32>
    %64 = arith.addf %61, %63 : vector<8x128xf32>
    %65 = vector.extract_strided_slice %64 {offsets = [0, 0], sizes = [8, 2], strides = [1, 1]} : vector<8x128xf32> to vector<8x2xf32>
    %c0_30 = arith.constant 0 : index
    %c0_31 = arith.constant 0 : index
    %66 = vector.load %arg5[%c0_30, %c0_31] : memref<8x2xf32, #tpu.memory_space<vmem>>, vector<8x2xf32>
    tpu.vector_store %arg5[%c0_30, %c0_31], %65 {strides = array<i32>} : memref<8x2xf32, #tpu.memory_space<vmem>>, vector<8x2xf32>,
    return
  }
  func.func @transform_0(%arg0: i32) -> (i32, i32) {
    %c0_i32 = arith.constant 0 : i32
    %c0_i32_0 = arith.constant 0 : i32
    return %arg0, %c0_i32 : i32, i32
  }
  func.func @transform_1(%arg0: i32) -> (i32, i32) {
    %c0_i32 = arith.constant 0 : i32
    %c0_i32_0 = arith.constant 0 : i32
    return %arg0, %c0_i32 : i32, i32
  }
  func.func @transform_2(%arg0: i32) -> (i32, i32) {
    %c0_i32 = arith.constant 0 : i32
    %c0_i32_0 = arith.constant 0 : i32
    %c0_i32_1 = arith.constant 0 : i32
    return %c0_i32, %c0_i32_0 : i32, i32
  }
  func.func @transform_3(%arg0: i32) -> (i32, i32) {
    %c0_i32 = arith.constant 0 : i32
    %c0_i32_0 = arith.constant 0 : i32
    %c0_i32_1 = arith.constant 0 : i32
    return %c0_i32, %c0_i32_0 : i32, i32
  }
  func.func @transform_4(%arg0: i32) -> (i32, i32) {
    %c0_i32 = arith.constant 0 : i32
    %c0_i32_0 = arith.constant 0 : i32
    return %arg0, %c0_i32 : i32, i32
  }
}

</mosaic_0001>

<llo_original>
// kernel: score_fn_forward.1
$region0: #{score_fn_forward.1}
  #allocation0 [shape = 'u32[]', space=smem, size = 0x4, offset = 0x4, fixed_abs, tag = 'smem constant byte address 0x4 - core index']
  #allocation1 [shape = 'u32[72,128]{1,0:T(1,128)}', space=vmem, size = 0x9000, scoped, tag = 'internal scratch']
  %s0 = inlined_call_operand.vmem [shape: f32[8,2], index: 0, kind: input, shape index: {}]
  %s1 = inlined_call_operand.vmem [shape: f32[8,1], index: 1, kind: input, shape index: {}]
  %s2 = inlined_call_operand.vmem [shape: f32[16,512], index: 2, kind: input, shape index: {}]
  %s3 = inlined_call_operand.vmem [shape: bf16[1280,256], index: 3, kind: input, shape index: {}]
  %s4 = inlined_call_operand.vmem [shape: f32[8,2], index: 4, kind: output, shape index: {}]
  %s5 = sld [smem:[#allocation0]]
  $region26: #{score_fn_forward.1} parent=0
    _
  %s7 = ssub.s32 1, %s5
  %s8 = scalar_select 0, %s7, %s5
  // Predicated region
  $region2: #{score_fn_forward.1} parent=0 // pred_check
    _
  $region3: #{score_fn_forward.1} parent=0 // pred_check_branch
    %10 = sbr.rel (0) target = $region5
  $region4: #{score_fn_forward.1} parent=0 // pred_region
    _
  $region5: #{score_fn_forward.1} parent=0 // pred_fallthru
    _
  // Predicated region
  $region6: #{score_fn_forward.1} parent=0 // pred_check
    _
  $region7: #{score_fn_forward.1} parent=0 // pred_check_branch
    %12 = sbr.rel (0) target = $region9
  $region8: #{score_fn_forward.1} parent=0 // pred_region
    _
  $region9: #{score_fn_forward.1} parent=0 // pred_fallthru
    _
  // Predicated region
  $region10: #{score_fn_forward.1} parent=0 // pred_check
    _
  $region11: #{score_fn_forward.1} parent=0 // pred_check_branch
    %14 = sbr.rel (0) target = $region13
  $region12: #{score_fn_forward.1} parent=0 // pred_region
    _
  $region13: #{score_fn_forward.1} parent=0 // pred_fallthru
    _
  // Predicated region
  $region14: #{score_fn_forward.1} parent=0 // pred_check
    _
  $region15: #{score_fn_forward.1} parent=0 // pred_check_branch
    %16 = sbr.rel (0) target = $region17
  $region16: #{score_fn_forward.1} parent=0 // pred_region
    _
  $region17: #{score_fn_forward.1} parent=0 // pred_fallthru
    _
  %v17 = vld [vmem:[%s0] sm:$0xff]
  %v18 = vld [vmem:[%s1] sm:$0xff]
  %v19 = vld [vmem:[%s2] ss:$8 sm:$0xf]
  %21 = vset.pattern.permute.xlu0 0
  %22 = vperm.xlu0 %21, %v17
  %v23 = vpop.permute.xlu0 %22
  %v26 = vperm.slane %v19, 0
  %v27 = vperm.slane %v19, 1
  %v28 = vperm.slane %v19, 2
  %v29 = vperm.slane %v19, 3
  %v34 = vmul.f32 %v23, %v26
  %v35 = vmul.f32 %v23, %v27
  %v36 = vmul.f32 %v23, %v28
  %v37 = vmul.f32 %v23, %v29
  %s38 = scalar_lea.vmem %s2, 1
  %v39 = vld [vmem:[%s38] ss:$8 sm:$0xf]
  %40 = vset.pattern.permute.xlu0 1
  %41 = vperm.xlu0 %40, %v17
  %v42 = vpop.permute.xlu0 %41
  %v45 = vperm.slane %v39, 0
  %v46 = vperm.slane %v39, 1
  %v47 = vperm.slane %v39, 2
  %v48 = vperm.slane %v39, 3
  %v53 = vmul.f32 %v42, %v45
  %v54 = vmul.f32 %v42, %v46
  %v55 = vmul.f32 %v42, %v47
  %v56 = vmul.f32 %v42, %v48
  %v57 = vadd.f32 %v34, %v53
  %v58 = vadd.f32 %v35, %v54
  %v59 = vadd.f32 %v36, %v55
  %v60 = vadd.f32 %v37, %v56
  %s61 = scalar_lea.vmem %s2, 2
  %v62 = vld [vmem:[%s61] ss:$8 sm:$0xf]
  %v64 = vperm.slane %v62, 0
  %v65 = vperm.slane %v62, 1
  %v66 = vperm.slane %v62, 2
  %v67 = vperm.slane %v62, 3
  %v72 = vadd.f32 %v57, %v64
  %v73 = vadd.f32 %v58, %v65
  %v74 = vadd.f32 %v59, %v66
  %v75 = vadd.f32 %v60, %v67
  %v76 = vmax.f32 %v72, 0.0
  %v77 = vmax.f32 %v73, 0.0
  %v78 = vmax.f32 %v74, 0.0
  %v79 = vmax.f32 %v75, 0.0
  %v80 = vpack.c.bf16 %v76, %v76
  %v81 = vpack.c.bf16 %v77, %v77
  %v82 = vpack.c.bf16 %v78, %v78
  %v83 = vpack.c.bf16 %v79, %v79
  %v84 = vld [vmem:[%s3] sm:$0xff]
  %v85 = vld [vmem:[%s3 + $0x8] sm:$0xff]
  %v86 = vld [vmem:[%s3 + $0x10] sm:$0xff]
  %v87 = vld [vmem:[%s3 + $0x18] sm:$0xff]
  %v88 = vld [vmem:[%s3 + $0x20] sm:$0xff]
  %v89 = vld [vmem:[%s3 + $0x28] sm:$0xff]
  %v90 = vld [vmem:[%s3 + $0x30] sm:$0xff]
  %v91 = vld [vmem:[%s3 + $0x38] sm:$0xff]
  %v92 = vld [vmem:[%s3 + $0x40] sm:$0xff]
  %v93 = vld [vmem:[%s3 + $0x48] sm:$0xff]
  %v94 = vld [vmem:[%s3 + $0x50] sm:$0xff]
  %v95 = vld [vmem:[%s3 + $0x58] sm:$0xff]
  %v96 = vld [vmem:[%s3 + $0x60] sm:$0xff]
  %v97 = vld [vmem:[%s3 + $0x68] sm:$0xff]
  %v98 = vld [vmem:[%s3 + $0x70] sm:$0xff]
  %v99 = vld [vmem:[%s3 + $0x78] sm:$0xff]
  %v100 = vld [vmem:[%s3 + $0x80] sm:$0xff]
  %v101 = vld [vmem:[%s3 + $0x88] sm:$0xff]
  %v102 = vld [vmem:[%s3 + $0x90] sm:$0xff]
  %v103 = vld [vmem:[%s3 + $0x98] sm:$0xff]
  %v104 = vld [vmem:[%s3 + $0xa0] sm:$0xff]
  %v105 = vld [vmem:[%s3 + $0xa8] sm:$0xff]
  %v106 = vld [vmem:[%s3 + $0xb0] sm:$0xff]
  %v107 = vld [vmem:[%s3 + $0xb8] sm:$0xff]
  %v108 = vld [vmem:[%s3 + $0xc0] sm:$0xff]
  %v109 = vld [vmem:[%s3 + $0xc8] sm:$0xff]
  %v110 = vld [vmem:[%s3 + $0xd0] sm:$0xff]
  %v111 = vld [vmem:[%s3 + $0xd8] sm:$0xff]
  %v112 = vld [vmem:[%s3 + $0xe0] sm:$0xff]
  %v113 = vld [vmem:[%s3 + $0xe8] sm:$0xff]
  %v114 = vld [vmem:[%s3 + $0xf0] sm:$0xff]
  %v115 = vld [vmem:[%s3 + $0xf8] sm:$0xff]
  %v116 = vld [vmem:[%s3 + $0x100] sm:$0xff]
  %v117 = vld [vmem:[%s3 + $0x108] sm:$0xff]
  %v118 = vld [vmem:[%s3 + $0x110] sm:$0xff]
  %v119 = vld [vmem:[%s3 + $0x118] sm:$0xff]
  %v120 = vld [vmem:[%s3 + $0x120] sm:$0xff]
  %v121 = vld [vmem:[%s3 + $0x128] sm:$0xff]
  %v122 = vld [vmem:[%s3 + $0x130] sm:$0xff]
  %v123 = vld [vmem:[%s3 + $0x138] sm:$0xff]
  %v124 = vld [vmem:[%s3 + $0x140] sm:$0xff]
  %v125 = vld [vmem:[%s3 + $0x148] sm:$0xff]
  %v126 = vld [vmem:[%s3 + $0x150] sm:$0xff]
  %v127 = vld [vmem:[%s3 + $0x158] sm:$0xff]
  %v128 = vld [vmem:[%s3 + $0x160] sm:$0xff]
  %v129 = vld [vmem:[%s3 + $0x168] sm:$0xff]
  %v130 = vld [vmem:[%s3 + $0x170] sm:$0xff]
  %v131 = vld [vmem:[%s3 + $0x178] sm:$0xff]
  %v132 = vld [vmem:[%s3 + $0x180] sm:$0xff]
  %v133 = vld [vmem:[%s3 + $0x188] sm:$0xff]
  %v134 = vld [vmem:[%s3 + $0x190] sm:$0xff]
  %v135 = vld [vmem:[%s3 + $0x198] sm:$0xff]
  %v136 = vld [vmem:[%s3 + $0x1a0] sm:$0xff]
  %v137 = vld [vmem:[%s3 + $0x1a8] sm:$0xff]
  %v138 = vld [vmem:[%s3 + $0x1b0] sm:$0xff]
  %v139 = vld [vmem:[%s3 + $0x1b8] sm:$0xff]
  %v140 = vld [vmem:[%s3 + $0x1c0] sm:$0xff]
  %v141 = vld [vmem:[%s3 + $0x1c8] sm:$0xff]
  %v142 = vld [vmem:[%s3 + $0x1d0] sm:$0xff]
  %v143 = vld [vmem:[%s3 + $0x1d8] sm:$0xff]
  %v144 = vld [vmem:[%s3 + $0x1e0] sm:$0xff]
  %v145 = vld [vmem:[%s3 + $0x1e8] sm:$0xff]
  %v146 = vld [vmem:[%s3 + $0x1f0] sm:$0xff]
  %v147 = vld [vmem:[%s3 + $0x1f8] sm:$0xff]
  %s148 = scalar_lea.vmem %s2, 3
  %v149 = vld [vmem:[%s148] ss:$8 sm:$0x3]
  %v151 = vperm.slane %v149, 0
  %v152 = vperm.slane %v149, 1
  %v219 = vunpack.c.l.b16 %v84
  %v220 = vunpack.c.h.b16 %v84
  %v221 = vunpack.c.l.b16 %v85
  %v222 = vunpack.c.h.b16 %v85
  %v223 = vunpack.c.l.b16 %v86
  %v224 = vunpack.c.h.b16 %v86
  %v225 = vunpack.c.l.b16 %v87
  %v226 = vunpack.c.h.b16 %v87
  %v227 = vunpack.c.l.b16 %v88
  %v228 = vunpack.c.h.b16 %v88
  %v229 = vunpack.c.l.b16 %v89
  %v230 = vunpack.c.h.b16 %v89
  %v231 = vunpack.c.l.b16 %v90
  %v232 = vunpack.c.h.b16 %v90
  %v233 = vunpack.c.l.b16 %v91
  %v234 = vunpack.c.h.b16 %v91
  %v235 = vunpack.c.l.b16 %v92
  %v236 = vunpack.c.h.b16 %v92
  %v237 = vunpack.c.l.b16 %v93
  %v238 = vunpack.c.h.b16 %v93
  %v239 = vunpack.c.l.b16 %v94
  %v240 = vunpack.c.h.b16 %v94
  %v241 = vunpack.c.l.b16 %v95
  %v242 = vunpack.c.h.b16 %v95
  %v243 = vunpack.c.l.b16 %v96
  %v244 = vunpack.c.h.b16 %v96
  %v245 = vunpack.c.l.b16 %v97
  %v246 = vunpack.c.h.b16 %v97
  %v247 = vunpack.c.l.b16 %v98
  %v248 = vunpack.c.h.b16 %v98
  %v249 = vunpack.c.l.b16 %v99
  %v250 = vunpack.c.h.b16 %v99
  %v251 = vunpack.c.l.b16 %v100
  %v252 = vunpack.c.h.b16 %v100
  %v253 = vunpack.c.l.b16 %v101
  %v254 = vunpack.c.h.b16 %v101
  %v255 = vunpack.c.l.b16 %v102
  %v256 = vunpack.c.h.b16 %v102
  %v257 = vunpack.c.l.b16 %v103
  %v258 = vunpack.c.h.b16 %v103
  %v259 = vunpack.c.l.b16 %v104
  %v260 = vunpack.c.h.b16 %v104
  %v261 = vunpack.c.l.b16 %v105
  %v262 = vunpack.c.h.b16 %v105
  %v263 = vunpack.c.l.b16 %v106
  %v264 = vunpack.c.h.b16 %v106
  %v265 = vunpack.c.l.b16 %v107
  %v266 = vunpack.c.h.b16 %v107
  %v267 = vunpack.c.l.b16 %v108
  %v268 = vunpack.c.h.b16 %v108
  %v269 = vunpack.c.l.b16 %v109
  %v270 = vunpack.c.h.b16 %v109
  %v271 = vunpack.c.l.b16 %v110
  %v272 = vunpack.c.h.b16 %v110
  %v273 = vunpack.c.l.b16 %v111
  %v274 = vunpack.c.h.b16 %v111
  %v275 = vunpack.c.l.b16 %v112
  %v276 = vunpack.c.h.b16 %v112
  %v277 = vunpack.c.l.b16 %v113
  %v278 = vunpack.c.h.b16 %v113
  %v279 = vunpack.c.l.b16 %v114
  %v280 = vunpack.c.h.b16 %v114
  %v281 = vunpack.c.l.b16 %v115
  %v282 = vunpack.c.h.b16 %v115
  %v283 = vunpack.c.l.b16 %v116
  %v284 = vunpack.c.h.b16 %v116
  %v285 = vunpack.c.l.b16 %v117
  %v286 = vunpack.c.h.b16 %v117
  %v287 = vunpack.c.l.b16 %v118
  %v288 = vunpack.c.h.b16 %v118
  %v289 = vunpack.c.l.b16 %v119
  %v290 = vunpack.c.h.b16 %v119
  %v291 = vunpack.c.l.b16 %v120
  %v292 = vunpack.c.h.b16 %v120
  %v293 = vunpack.c.l.b16 %v121
  %v294 = vunpack.c.h.b16 %v121
  %v295 = vunpack.c.l.b16 %v122
  %v296 = vunpack.c.h.b16 %v122
  %v297 = vunpack.c.l.b16 %v123
  %v298 = vunpack.c.h.b16 %v123
  %v299 = vunpack.c.l.b16 %v124
  %v300 = vunpack.c.h.b16 %v124
  %v301 = vunpack.c.l.b16 %v125
  %v302 = vunpack.c.h.b16 %v125
  %v303 = vunpack.c.l.b16 %v126
  %v304 = vunpack.c.h.b16 %v126
  %v305 = vunpack.c.l.b16 %v127
  %v306 = vunpack.c.h.b16 %v127
  %v307 = vunpack.c.l.b16 %v128
  %v308 = vunpack.c.h.b16 %v128
  %v309 = vunpack.c.l.b16 %v129
  %v310 = vunpack.c.h.b16 %v129
  %v311 = vunpack.c.l.b16 %v130
  %v312 = vunpack.c.h.b16 %v130
  %v313 = vunpack.c.l.b16 %v131
  %v314 = vunpack.c.h.b16 %v131
  %v315 = vunpack.c.l.b16 %v132
  %v316 = vunpack.c.h.b16 %v132
  %v317 = vunpack.c.l.b16 %v133
  %v318 = vunpack.c.h.b16 %v133
  %v319 = vunpack.c.l.b16 %v134
  %v320 = vunpack.c.h.b16 %v134
  %v321 = vunpack.c.l.b16 %v135
  %v322 = vunpack.c.h.b16 %v135
  %v323 = vunpack.c.l.b16 %v136
  %v324 = vunpack.c.h.b16 %v136
  %v325 = vunpack.c.l.b16 %v137
  %v326 = vunpack.c.h.b16 %v137
  %v327 = vunpack.c.l.b16 %v138
  %v328 = vunpack.c.h.b16 %v138
  %v329 = vunpack.c.l.b16 %v139
  %v330 = vunpack.c.h.b16 %v139
  %v331 = vunpack.c.l.b16 %v140
  %v332 = vunpack.c.h.b16 %v140
  %v333 = vunpack.c.l.b16 %v141
  %v334 = vunpack.c.h.b16 %v141
  %v335 = vunpack.c.l.b16 %v142
  %v336 = vunpack.c.h.b16 %v142
  %v337 = vunpack.c.l.b16 %v143
  %v338 = vunpack.c.h.b16 %v143
  %v339 = vunpack.c.l.b16 %v144
  %v340 = vunpack.c.h.b16 %v144
  %v341 = vunpack.c.l.b16 %v145
  %v342 = vunpack.c.h.b16 %v145
  %v343 = vunpack.c.l.b16 %v146
  %v344 = vunpack.c.h.b16 %v146
  %v345 = vunpack.c.l.b16 %v147
  %v346 = vunpack.c.h.b16 %v147
  %v347 = vpack.c.b16 %v221, %v219
  %v348 = vpack.c.b16 %v222, %v220
  %v349 = vpack.c.b16 %v225, %v223
  %v350 = vpack.c.b16 %v226, %v224
  %v351 = vpack.c.b16 %v229, %v227
  %v352 = vpack.c.b16 %v230, %v228
  %v353 = vpack.c.b16 %v233, %v231
  %v354 = vpack.c.b16 %v234, %v232
  %v355 = vpack.c.b16 %v237, %v235
  %v356 = vpack.c.b16 %v238, %v236
  %v357 = vpack.c.b16 %v241, %v239
  %v358 = vpack.c.b16 %v242, %v240
  %v359 = vpack.c.b16 %v245, %v243
  %v360 = vpack.c.b16 %v246, %v244
  %v361 = vpack.c.b16 %v249, %v247
  %v362 = vpack.c.b16 %v250, %v248
  %v363 = vpack.c.b16 %v253, %v251
  %v364 = vpack.c.b16 %v254, %v252
  %v365 = vpack.c.b16 %v257, %v255
  %v366 = vpack.c.b16 %v258, %v256
  %v367 = vpack.c.b16 %v261, %v259
  %v368 = vpack.c.b16 %v262, %v260
  %v369 = vpack.c.b16 %v265, %v263
  %v370 = vpack.c.b16 %v266, %v264
  %v371 = vpack.c.b16 %v269, %v267
  %v372 = vpack.c.b16 %v270, %v268
  %v373 = vpack.c.b16 %v273, %v271
  %v374 = vpack.c.b16 %v274, %v272
  %v375 = vpack.c.b16 %v277, %v275
  %v376 = vpack.c.b16 %v278, %v276
  %v377 = vpack.c.b16 %v281, %v279
  %v378 = vpack.c.b16 %v282, %v280
  %v379 = vpack.c.b16 %v285, %v283
  %v380 = vpack.c.b16 %v286, %v284
  %v381 = vpack.c.b16 %v289, %v287
  %v382 = vpack.c.b16 %v290, %v288
  %v383 = vpack.c.b16 %v293, %v291
  %v384 = vpack.c.b16 %v294, %v292
  %v385 = vpack.c.b16 %v297, %v295
  %v386 = vpack.c.b16 %v298, %v296
  %v387 = vpack.c.b16 %v301, %v299
  %v388 = vpack.c.b16 %v302, %v300
  %v389 = vpack.c.b16 %v305, %v303
  %v390 = vpack.c.b16 %v306, %v304
  %v391 = vpack.c.b16 %v309, %v307
  %v392 = vpack.c.b16 %v310, %v308
  %v393 = vpack.c.b16 %v313, %v311
  %v394 = vpack.c.b16 %v314, %v312
  %v395 = vpack.c.b16 %v317, %v315
  %v396 = vpack.c.b16 %v318, %v316
  %v397 = vpack.c.b16 %v321, %v319
  %v398 = vpack.c.b16 %v322, %v320
  %v399 = vpack.c.b16 %v325, %v323
  %v400 = vpack.c.b16 %v326, %v324
  %v401 = vpack.c.b16 %v329, %v327
  %v402 = vpack.c.b16 %v330, %v328
  %v403 = vpack.c.b16 %v333, %v331
  %v404 = vpack.c.b16 %v334, %v332
  %v405 = vpack.c.b16 %v337, %v335
  %v406 = vpack.c.b16 %v338, %v336
  %v407 = vpack.c.b16 %v341, %v339
  %v408 = vpack.c.b16 %v342, %v340
  %v409 = vpack.c.b16 %v345, %v343
  %v410 = vpack.c.b16 %v346, %v344
  %475 = vmatpush.bf16.msra.mxu0 %v361
  %476 = vmatpush.bf16.msra.mxu0 %v359
  %477 = vmatpush.bf16.msra.mxu0 %v357
  %478 = vmatpush.bf16.msra.mxu0 %v355
  %479 = vmatpush.bf16.msra.mxu0 %v353
  %480 = vmatpush.bf16.msra.mxu0 %v351
  %481 = vmatpush.bf16.msra.mxu0 %v349
  %482 = vmatpush.bf16.msra.mxu0 %v347
  %483 = vmatmul.bf16.gmra.mxu0 %v80
  %v484 = vpop.f32.mrf.mxu0
  %v485 = vadd.f32 %v151, %v484
  %v486 = vpop.f32.mrf.mxu0
  %487 = vdwg.mxu0
  %488 = vmatpush.bf16.msra.mxu0 %v377
  %489 = vmatpush.bf16.msra.mxu0 %v375
  %490 = vmatpush.bf16.msra.mxu0 %v373
  %491 = vmatpush.bf16.msra.mxu0 %v371
  %492 = vmatpush.bf16.msra.mxu0 %v369
  %493 = vmatpush.bf16.msra.mxu0 %v367
  %494 = vmatpush.bf16.msra.mxu0 %v365
  %495 = vmatpush.bf16.msra.mxu0 %v363
  %496 = vmatmul.bf16.gmra.mxu0 %v81
  %v497 = vpop.f32.mrf.mxu0
  %v498 = vadd.f32 %v485, %v497
  %v499 = vpop.f32.mrf.mxu0
  %500 = vdwg.mxu0
  %501 = vmatpush.bf16.msra.mxu0 %v393
  %502 = vmatpush.bf16.msra.mxu0 %v391
  %503 = vmatpush.bf16.msra.mxu0 %v389
  %504 = vmatpush.bf16.msra.mxu0 %v387
  %505 = vmatpush.bf16.msra.mxu0 %v385
  %506 = vmatpush.bf16.msra.mxu0 %v383
  %507 = vmatpush.bf16.msra.mxu0 %v381
  %508 = vmatpush.bf16.msra.mxu0 %v379
  %509 = vmatmul.bf16.gmra.mxu0 %v82
  %v510 = vpop.f32.mrf.mxu0
  %v511 = vadd.f32 %v498, %v510
  %v512 = vpop.f32.mrf.mxu0
  %513 = vdwg.mxu0
  %514 = vmatpush.bf16.msra.mxu0 %v409
  %515 = vmatpush.bf16.msra.mxu0 %v407
  %516 = vmatpush.bf16.msra.mxu0 %v405
  %517 = vmatpush.bf16.msra.mxu0 %v403
  %518 = vmatpush.bf16.msra.mxu0 %v401
  %519 = vmatpush.bf16.msra.mxu0 %v399
  %520 = vmatpush.bf16.msra.mxu0 %v397
  %521 = vmatpush.bf16.msra.mxu0 %v395
  %522 = vmatmul.bf16.gmra.mxu0 %v83
  %v523 = vpop.f32.mrf.mxu0
  %v524 = vadd.f32 %v511, %v523
  %v525 = vpop.f32.mrf.mxu0
  %526 = vdwg.mxu0
  %527 = vmatpush.bf16.msra.mxu0 %v362
  %528 = vmatpush.bf16.msra.mxu0 %v360
  %529 = vmatpush.bf16.msra.mxu0 %v358
  %530 = vmatpush.bf16.msra.mxu0 %v356
  %531 = vmatpush.bf16.msra.mxu0 %v354
  %532 = vmatpush.bf16.msra.mxu0 %v352
  %533 = vmatpush.bf16.msra.mxu0 %v350
  %534 = vmatpush.bf16.msra.mxu0 %v348
  %535 = vmatmul.bf16.gmra.mxu0 %v80
  %v536 = vpop.f32.mrf.mxu0
  %v537 = vadd.f32 %v152, %v536
  %v538 = vpop.f32.mrf.mxu0
  %539 = vdwg.mxu0
  %540 = vmatpush.bf16.msra.mxu0 %v378
  %541 = vmatpush.bf16.msra.mxu0 %v376
  %542 = vmatpush.bf16.msra.mxu0 %v374
  %543 = vmatpush.bf16.msra.mxu0 %v372
  %544 = vmatpush.bf16.msra.mxu0 %v370
  %545 = vmatpush.bf16.msra.mxu0 %v368
  %546 = vmatpush.bf16.msra.mxu0 %v366
  %547 = vmatpush.bf16.msra.mxu0 %v364
  %548 = vmatmul.bf16.gmra.mxu0 %v81
  %v549 = vpop.f32.mrf.mxu0
  %v550 = vadd.f32 %v537, %v549
  %v551 = vpop.f32.mrf.mxu0
  %552 = vdwg.mxu0
  %553 = vmatpush.bf16.msra.mxu0 %v394
  %554 = vmatpush.bf16.msra.mxu0 %v392
  %555 = vmatpush.bf16.msra.mxu0 %v390
  %556 = vmatpush.bf16.msra.mxu0 %v388
  %557 = vmatpush.bf16.msra.mxu0 %v386
  %558 = vmatpush.bf16.msra.mxu0 %v384
  %559 = vmatpush.bf16.msra.mxu0 %v382
  %560 = vmatpush.bf16.msra.mxu0 %v380
  %561 = vmatmul.bf16.gmra.mxu0 %v82
  %v562 = vpop.f32.mrf.mxu0
  %v563 = vadd.f32 %v550, %v562
  %v564 = vpop.f32.mrf.mxu0
  %565 = vdwg.mxu0
  %566 = vmatpush.bf16.msra.mxu0 %v410
  %567 = vmatpush.bf16.msra.mxu0 %v408
  %568 = vmatpush.bf16.msra.mxu0 %v406
  %569 = vmatpush.bf16.msra.mxu0 %v404
  %570 = vmatpush.bf16.msra.mxu0 %v402
  %571 = vmatpush.bf16.msra.mxu0 %v400
  %572 = vmatpush.bf16.msra.mxu0 %v398
  %573 = vmatpush.bf16.msra.mxu0 %v396
  %574 = vmatmul.bf16.gmra.mxu0 %v83
  %v575 = vpop.f32.mrf.mxu0
  %v576 = vadd.f32 %v563, %v575
  %v577 = vpop.f32.mrf.mxu0
  %578 = vdwg.mxu0
  %v579 = vmax.f32 %v524, 0.0
  %v580 = vmax.f32 %v576, 0.0
  %v581 = vpack.c.bf16 %v579, %v579
  %v582 = vpack.c.bf16 %v580, %v580
  %v583 = vld [vmem:[%s3 + $0x200] sm:$0xf]
  %v584 = vld [vmem:[%s3 + $0x208] sm:$0xf]
  %v585 = vld [vmem:[%s3 + $0x210] sm:$0xf]
  %v586 = vld [vmem:[%s3 + $0x218] sm:$0xf]
  %v587 = vld [vmem:[%s3 + $0x220] sm:$0xf]
  %v588 = vld [vmem:[%s3 + $0x228] sm:$0xf]
  %v589 = vld [vmem:[%s3 + $0x230] sm:$0xf]
  %v590 = vld [vmem:[%s3 + $0x238] sm:$0xf]
  %v591 = vld [vmem:[%s3 + $0x240] sm:$0xf]
  %v592 = vld [vmem:[%s3 + $0x248] sm:$0xf]
  %v593 = vld [vmem:[%s3 + $0x250] sm:$0xf]
  %v594 = vld [vmem:[%s3 + $0x258] sm:$0xf]
  %v595 = vld [vmem:[%s3 + $0x260] sm:$0xf]
  %v596 = vld [vmem:[%s3 + $0x268] sm:$0xf]
  %v597 = vld [vmem:[%s3 + $0x270] sm:$0xf]
  %v598 = vld [vmem:[%s3 + $0x278] sm:$0xf]
  %v599 = vld [vmem:[%s3 + $0x280] sm:$0xf]
  %v600 = vld [vmem:[%s3 + $0x288] sm:$0xf]
  %v601 = vld [vmem:[%s3 + $0x290] sm:$0xf]
  %v602 = vld [vmem:[%s3 + $0x298] sm:$0xf]
  %v603 = vld [vmem:[%s3 + $0x2a0] sm:$0xf]
  %v604 = vld [vmem:[%s3 + $0x2a8] sm:$0xf]
  %v605 = vld [vmem:[%s3 + $0x2b0] sm:$0xf]
  %v606 = vld [vmem:[%s3 + $0x2b8] sm:$0xf]
  %v607 = vld [vmem:[%s3 + $0x2c0] sm:$0xf]
  %v608 = vld [vmem:[%s3 + $0x2c8] sm:$0xf]
  %v609 = vld [vmem:[%s3 + $0x2d0] sm:$0xf]
  %v610 = vld [vmem:[%s3 + $0x2d8] sm:$0xf]
  %v611 = vld [vmem:[%s3 + $0x2e0] sm:$0xf]
  %v612 = vld [vmem:[%s3 + $0x2e8] sm:$0xf]
  %v613 = vld [vmem:[%s3 + $0x2f0] sm:$0xf]
  %v614 = vld [vmem:[%s3 + $0x2f8] sm:$0xf]
  %v615 = vld [vmem:[%s2 + $0x4] ss:$0 sm:$0xff]
  %v648 = vunpack.c.l.b16 %v583
  %v649 = vunpack.c.l.b16 %v584
  %v650 = vunpack.c.l.b16 %v585
  %v651 = vunpack.c.l.b16 %v586
  %v652 = vunpack.c.l.b16 %v587
  %v653 = vunpack.c.l.b16 %v588
  %v654 = vunpack.c.l.b16 %v589
  %v655 = vunpack.c.l.b16 %v590
  %v656 = vunpack.c.l.b16 %v591
  %v657 = vunpack.c.l.b16 %v592
  %v658 = vunpack.c.l.b16 %v593
  %v659 = vunpack.c.l.b16 %v594
  %v660 = vunpack.c.l.b16 %v595
  %v661 = vunpack.c.l.b16 %v596
  %v662 = vunpack.c.l.b16 %v597
  %v663 = vunpack.c.l.b16 %v598
  %v664 = vunpack.c.l.b16 %v599
  %v665 = vunpack.c.l.b16 %v600
  %v666 = vunpack.c.l.b16 %v601
  %v667 = vunpack.c.l.b16 %v602
  %v668 = vunpack.c.l.b16 %v603
  %v669 = vunpack.c.l.b16 %v604
  %v670 = vunpack.c.l.b16 %v605
  %v671 = vunpack.c.l.b16 %v606
  %v672 = vunpack.c.l.b16 %v607
  %v673 = vunpack.c.l.b16 %v608
  %v674 = vunpack.c.l.b16 %v609
  %v675 = vunpack.c.l.b16 %v610
  %v676 = vunpack.c.l.b16 %v611
  %v677 = vunpack.c.l.b16 %v612
  %v678 = vunpack.c.l.b16 %v613
  %v679 = vunpack.c.l.b16 %v614
  %v680 = vpack.c.b16 %v649, %v648
  %v681 = vpack.c.b16 %v651, %v650
  %v682 = vpack.c.b16 %v653, %v652
  %v683 = vpack.c.b16 %v655, %v654
  %v684 = vpack.c.b16 %v657, %v656
  %v685 = vpack.c.b16 %v659, %v658
  %v686 = vpack.c.b16 %v661, %v660
  %v687 = vpack.c.b16 %v663, %v662
  %v688 = vpack.c.b16 %v665, %v664
  %v689 = vpack.c.b16 %v667, %v666
  %v690 = vpack.c.b16 %v669, %v668
  %v691 = vpack.c.b16 %v671, %v670
  %v692 = vpack.c.b16 %v673, %v672
  %v693 = vpack.c.b16 %v675, %v674
  %v694 = vpack.c.b16 %v677, %v676
  %v695 = vpack.c.b16 %v679, %v678
  %712 = vmatpush.bf16.msra.mxu0 %v687
  %713 = vmatpush.bf16.msra.mxu0 %v686
  %714 = vmatpush.bf16.msra.mxu0 %v685
  %715 = vmatpush.bf16.msra.mxu0 %v684
  %716 = vmatpush.bf16.msra.mxu0 %v683
  %717 = vmatpush.bf16.msra.mxu0 %v682
  %718 = vmatpush.bf16.msra.mxu0 %v681
  %719 = vmatpush.bf16.msra.mxu0 %v680
  %720 = vmatmul.bf16.gmra.mxu0 %v581
  %v721 = vpop.f32.mrf.mxu0
  %v722 = vadd.f32 %v615, %v721
  %v723 = vpop.f32.mrf.mxu0
  %724 = vdwg.mxu0
  %725 = vmatpush.bf16.msra.mxu0 %v695
  %726 = vmatpush.bf16.msra.mxu0 %v694
  %727 = vmatpush.bf16.msra.mxu0 %v693
  %728 = vmatpush.bf16.msra.mxu0 %v692
  %729 = vmatpush.bf16.msra.mxu0 %v691
  %730 = vmatpush.bf16.msra.mxu0 %v690
  %731 = vmatpush.bf16.msra.mxu0 %v689
  %732 = vmatpush.bf16.msra.mxu0 %v688
  %733 = vmatmul.bf16.gmra.mxu0 %v582
  %v734 = vpop.f32.mrf.mxu0
  %v735 = vadd.f32 %v722, %v734
  %v736 = vpop.f32.mrf.mxu0
  %737 = vdwg.mxu0
  %v738 = vld [vmem:[%s2 + $0x5] ss:$0 sm:$0xff]
  %740 = vset.pattern.permute.xlu0 0
  %741 = vperm.xlu0 %740, %v18
  %v742 = vpop.permute.xlu0 %741
  %v744 = vmul.f32 %v742, %v738
  %v745 = vld [vmem:[%s2 + $0x6] ss:$0 sm:$0xff]
  %v746 = vadd.f32 %v744, %v745
  %v747 = vmax.f32 %v746, 0.0
  %v748 = vpack.c.bf16 %v747, %v747
  %v749 = vld [vmem:[%s3 + $0x300] sm:$0xf]
  %v750 = vld [vmem:[%s3 + $0x308] sm:$0xf]
  %v751 = vld [vmem:[%s3 + $0x310] sm:$0xf]
  %v752 = vld [vmem:[%s3 + $0x318] sm:$0xf]
  %v753 = vld [vmem:[%s3 + $0x320] sm:$0xf]
  %v754 = vld [vmem:[%s3 + $0x328] sm:$0xf]
  %v755 = vld [vmem:[%s3 + $0x330] sm:$0xf]
  %v756 = vld [vmem:[%s3 + $0x338] sm:$0xf]
  %v757 = vld [vmem:[%s3 + $0x340] sm:$0xf]
  %v758 = vld [vmem:[%s3 + $0x348] sm:$0xf]
  %v759 = vld [vmem:[%s3 + $0x350] sm:$0xf]
  %v760 = vld [vmem:[%s3 + $0x358] sm:$0xf]
  %v761 = vld [vmem:[%s3 + $0x360] sm:$0xf]
  %v762 = vld [vmem:[%s3 + $0x368] sm:$0xf]
  %v763 = vld [vmem:[%s3 + $0x370] sm:$0xf]
  %v764 = vld [vmem:[%s3 + $0x378] sm:$0xf]
  %v765 = vld [vmem:[%s2 + $0x7] ss:$0 sm:$0xff]
  %v782 = vunpack.c.l.b16 %v749
  %v783 = vunpack.c.l.b16 %v750
  %v784 = vunpack.c.l.b16 %v751
  %v785 = vunpack.c.l.b16 %v752
  %v786 = vunpack.c.l.b16 %v753
  %v787 = vunpack.c.l.b16 %v754
  %v788 = vunpack.c.l.b16 %v755
  %v789 = vunpack.c.l.b16 %v756
  %v790 = vunpack.c.l.b16 %v757
  %v791 = vunpack.c.l.b16 %v758
  %v792 = vunpack.c.l.b16 %v759
  %v793 = vunpack.c.l.b16 %v760
  %v794 = vunpack.c.l.b16 %v761
  %v795 = vunpack.c.l.b16 %v762
  %v796 = vunpack.c.l.b16 %v763
  %v797 = vunpack.c.l.b16 %v764
  %v798 = vpack.c.b16 %v783, %v782
  %v799 = vpack.c.b16 %v785, %v784
  %v800 = vpack.c.b16 %v787, %v786
  %v801 = vpack.c.b16 %v789, %v788
  %v802 = vpack.c.b16 %v791, %v790
  %v803 = vpack.c.b16 %v793, %v792
  %v804 = vpack.c.b16 %v795, %v794
  %v805 = vpack.c.b16 %v797, %v796
  %814 = vmatpush.bf16.msra.mxu0 %v805
  %815 = vmatpush.bf16.msra.mxu0 %v804
  %816 = vmatpush.bf16.msra.mxu0 %v803
  %817 = vmatpush.bf16.msra.mxu0 %v802
  %818 = vmatpush.bf16.msra.mxu0 %v801
  %819 = vmatpush.bf16.msra.mxu0 %v800
  %820 = vmatpush.bf16.msra.mxu0 %v799
  %821 = vmatpush.bf16.msra.mxu0 %v798
  %822 = vmatmul.bf16.gmra.mxu0 %v748
  %v823 = vpop.f32.mrf.mxu0
  %v824 = vadd.f32 %v765, %v823
  %v825 = vpop.f32.mrf.mxu0
  %826 = vdwg.mxu0
  %v827 = vmax.f32 %v824, 0.0
  %v828 = vpack.c.bf16 %v827, %v827
  %v829 = vld [vmem:[%s3 + $0x380] sm:$0xf]
  %v830 = vld [vmem:[%s3 + $0x388] sm:$0xf]
  %v831 = vld [vmem:[%s3 + $0x390] sm:$0xf]
  %v832 = vld [vmem:[%s3 + $0x398] sm:$0xf]
  %v833 = vld [vmem:[%s3 + $0x3a0] sm:$0xf]
  %v834 = vld [vmem:[%s3 + $0x3a8] sm:$0xf]
  %v835 = vld [vmem:[%s3 + $0x3b0] sm:$0xf]
  %v836 = vld [vmem:[%s3 + $0x3b8] sm:$0xf]
  %v837 = vld [vmem:[%s3 + $0x3c0] sm:$0xf]
  %v838 = vld [vmem:[%s3 + $0x3c8] sm:$0xf]
  %v839 = vld [vmem:[%s3 + $0x3d0] sm:$0xf]
  %v840 = vld [vmem:[%s3 + $0x3d8] sm:$0xf]
  %v841 = vld [vmem:[%s3 + $0x3e0] sm:$0xf]
  %v842 = vld [vmem:[%s3 + $0x3e8] sm:$0xf]
  %v843 = vld [vmem:[%s3 + $0x3f0] sm:$0xf]
  %v844 = vld [vmem:[%s3 + $0x3f8] sm:$0xf]
  %v845 = vld [vmem:[%s2 + $0x20] ss:$0 sm:$0xff]
  %v862 = vunpack.c.l.b16 %v829
  %v863 = vunpack.c.l.b16 %v830
  %v864 = vunpack.c.l.b16 %v831
  %v865 = vunpack.c.l.b16 %v832
  %v866 = vunpack.c.l.b16 %v833
  %v867 = vunpack.c.l.b16 %v834
  %v868 = vunpack.c.l.b16 %v835
  %v869 = vunpack.c.l.b16 %v836
  %v870 = vunpack.c.l.b16 %v837
  %v871 = vunpack.c.l.b16 %v838
  %v872 = vunpack.c.l.b16 %v839
  %v873 = vunpack.c.l.b16 %v840
  %v874 = vunpack.c.l.b16 %v841
  %v875 = vunpack.c.l.b16 %v842
  %v876 = vunpack.c.l.b16 %v843
  %v877 = vunpack.c.l.b16 %v844
  %v878 = vpack.c.b16 %v863, %v862
  %v879 = vpack.c.b16 %v865, %v864
  %v880 = vpack.c.b16 %v867, %v866
  %v881 = vpack.c.b16 %v869, %v868
  %v882 = vpack.c.b16 %v871, %v870
  %v883 = vpack.c.b16 %v873, %v872
  %v884 = vpack.c.b16 %v875, %v874
  %v885 = vpack.c.b16 %v877, %v876
  %894 = vmatpush.bf16.msra.mxu0 %v885
  %895 = vmatpush.bf16.msra.mxu0 %v884
  %896 = vmatpush.bf16.msra.mxu0 %v883
  %897 = vmatpush.bf16.msra.mxu0 %v882
  %898 = vmatpush.bf16.msra.mxu0 %v881
  %899 = vmatpush.bf16.msra.mxu0 %v880
  %900 = vmatpush.bf16.msra.mxu0 %v879
  %901 = vmatpush.bf16.msra.mxu0 %v878
  %902 = vmatmul.bf16.gmra.mxu0 %v828
  %v903 = vpop.f32.mrf.mxu0
  %v904 = vadd.f32 %v845, %v903
  %v905 = vpop.f32.mrf.mxu0
  %906 = vdwg.mxu0
  %v907 = vpack.c.bf16 %v735, %v735
  %v908 = vld [vmem:[%s3 + $0x400] sm:$0xf]
  %v909 = vld [vmem:[%s3 + $0x408] sm:$0xf]
  %v910 = vld [vmem:[%s3 + $0x410] sm:$0xf]
  %v911 = vld [vmem:[%s3 + $0x418] sm:$0xf]
  %v912 = vld [vmem:[%s3 + $0x420] sm:$0xf]
  %v913 = vld [vmem:[%s3 + $0x428] sm:$0xf]
  %v914 = vld [vmem:[%s3 + $0x430] sm:$0xf]
  %v915 = vld [vmem:[%s3 + $0x438] sm:$0xf]
  %v916 = vld [vmem:[%s3 + $0x440] sm:$0xf]
  %v917 = vld [vmem:[%s3 + $0x448] sm:$0xf]
  %v918 = vld [vmem:[%s3 + $0x450] sm:$0xf]
  %v919 = vld [vmem:[%s3 + $0x458] sm:$0xf]
  %v920 = vld [vmem:[%s3 + $0x460] sm:$0xf]
  %v921 = vld [vmem:[%s3 + $0x468] sm:$0xf]
  %v922 = vld [vmem:[%s3 + $0x470] sm:$0xf]
  %v923 = vld [vmem:[%s3 + $0x478] sm:$0xf]
  %v924 = vpack.c.bf16 %v904, %v904
  %v925 = vld [vmem:[%s3 + $0x480] sm:$0xf]
  %v926 = vld [vmem:[%s3 + $0x488] sm:$0xf]
  %v927 = vld [vmem:[%s3 + $0x490] sm:$0xf]
  %v928 = vld [vmem:[%s3 + $0x498] sm:$0xf]
  %v929 = vld [vmem:[%s3 + $0x4a0] sm:$0xf]
  %v930 = vld [vmem:[%s3 + $0x4a8] sm:$0xf]
  %v931 = vld [vmem:[%s3 + $0x4b0] sm:$0xf]
  %v932 = vld [vmem:[%s3 + $0x4b8] sm:$0xf]
  %v933 = vld [vmem:[%s3 + $0x4c0] sm:$0xf]
  %v934 = vld [vmem:[%s3 + $0x4c8] sm:$0xf]
  %v935 = vld [vmem:[%s3 + $0x4d0] sm:$0xf]
  %v936 = vld [vmem:[%s3 + $0x4d8] sm:$0xf]
  %v937 = vld [vmem:[%s3 + $0x4e0] sm:$0xf]
  %v938 = vld [vmem:[%s3 + $0x4e8] sm:$0xf]
  %v939 = vld [vmem:[%s3 + $0x4f0] sm:$0xf]
  %v940 = vld [vmem:[%s3 + $0x4f8] sm:$0xf]
  %v957 = vunpack.c.l.b16 %v925
  %v958 = vunpack.c.l.b16 %v926
  %v959 = vunpack.c.l.b16 %v927
  %v960 = vunpack.c.l.b16 %v928
  %v961 = vunpack.c.l.b16 %v929
  %v962 = vunpack.c.l.b16 %v930
  %v963 = vunpack.c.l.b16 %v931
  %v964 = vunpack.c.l.b16 %v932
  %v965 = vunpack.c.l.b16 %v933
  %v966 = vunpack.c.l.b16 %v934
  %v967 = vunpack.c.l.b16 %v935
  %v968 = vunpack.c.l.b16 %v936
  %v969 = vunpack.c.l.b16 %v937
  %v970 = vunpack.c.l.b16 %v938
  %v971 = vunpack.c.l.b16 %v939
  %v972 = vunpack.c.l.b16 %v940
  %v973 = vpack.c.b16 %v958, %v957
  %v974 = vpack.c.b16 %v960, %v959
  %v975 = vpack.c.b16 %v962, %v961
  %v976 = vpack.c.b16 %v964, %v963
  %v977 = vpack.c.b16 %v966, %v965
  %v978 = vpack.c.b16 %v968, %v967
  %v979 = vpack.c.b16 %v970, %v969
  %v980 = vpack.c.b16 %v972, %v971
  %989 = vmatpush.bf16.msra.mxu0 %v980
  %990 = vmatpush.bf16.msra.mxu0 %v979
  %991 = vmatpush.bf16.msra.mxu0 %v978
  %992 = vmatpush.bf16.msra.mxu0 %v977
  %993 = vmatpush.bf16.msra.mxu0 %v976
  %994 = vmatpush.bf16.msra.mxu0 %v975
  %995 = vmatpush.bf16.msra.mxu0 %v974
  %996 = vmatpush.bf16.msra.mxu0 %v973
  %997 = vmatmul.bf16.gmra.mxu0 %v924
  %v998 = vpop.f32.mrf.mxu0
  %v999 = vadd.f32 0.0, %v998
  %v1000 = vpop.f32.mrf.mxu0
  %1001 = vdwg.mxu0
  %v1018 = vunpack.c.l.b16 %v908
  %v1019 = vunpack.c.l.b16 %v909
  %v1020 = vunpack.c.l.b16 %v910
  %v1021 = vunpack.c.l.b16 %v911
  %v1022 = vunpack.c.l.b16 %v912
  %v1023 = vunpack.c.l.b16 %v913
  %v1024 = vunpack.c.l.b16 %v914
  %v1025 = vunpack.c.l.b16 %v915
  %v1026 = vunpack.c.l.b16 %v916
  %v1027 = vunpack.c.l.b16 %v917
  %v1028 = vunpack.c.l.b16 %v918
  %v1029 = vunpack.c.l.b16 %v919
  %v1030 = vunpack.c.l.b16 %v920
  %v1031 = vunpack.c.l.b16 %v921
  %v1032 = vunpack.c.l.b16 %v922
  %v1033 = vunpack.c.l.b16 %v923
  %v1034 = vpack.c.b16 %v1019, %v1018
  %v1035 = vpack.c.b16 %v1021, %v1020
  %v1036 = vpack.c.b16 %v1023, %v1022
  %v1037 = vpack.c.b16 %v1025, %v1024
  %v1038 = vpack.c.b16 %v1027, %v1026
  %v1039 = vpack.c.b16 %v1029, %v1028
  %v1040 = vpack.c.b16 %v1031, %v1030
  %v1041 = vpack.c.b16 %v1033, %v1032
  %1050 = vmatpush.bf16.msra.mxu0 %v1041
  %1051 = vmatpush.bf16.msra.mxu0 %v1040
  %1052 = vmatpush.bf16.msra.mxu0 %v1039
  %1053 = vmatpush.bf16.msra.mxu0 %v1038
  %1054 = vmatpush.bf16.msra.mxu0 %v1037
  %1055 = vmatpush.bf16.msra.mxu0 %v1036
  %1056 = vmatpush.bf16.msra.mxu0 %v1035
  %1057 = vmatpush.bf16.msra.mxu0 %v1034
  %1058 = vmatmul.bf16.gmra.mxu0 %v907
  %v1059 = vpop.f32.mrf.mxu0
  %v1060 = vadd.f32 %v999, %v1059
  %v1061 = vpop.f32.mrf.mxu0
  %1062 = vdwg.mxu0
  %v1063 = vld [vmem:[%s2 + $0x21] ss:$0 sm:$0xff]
  %v1064 = vadd.f32 %v1060, %v1063
  %vm1065 = vcmask 15360
  %1066 = vst.msk [vmem:[%s4] sm:$0xff] %vm1065, %v1064
  // Predicated region
  $region18: #{score_fn_forward.1} parent=0 // pred_check
    _
  $region19: #{score_fn_forward.1} parent=0 // pred_check_branch
    %1068 = sbr.rel (0) target = $region21
  $region20: #{score_fn_forward.1} parent=0 // pred_region
    _
  $region21: #{score_fn_forward.1} parent=0 // pred_fallthru
    _
  // Predicated region
  $region22: #{score_fn_forward.1} parent=0 // pred_check
    _
  $region23: #{score_fn_forward.1} parent=0 // pred_check_branch
    %1070 = sbr.rel (0) target = $region25
  $region24: #{score_fn_forward.1} parent=0 // pred_region
    _
  $region25: #{score_fn_forward.1} parent=0 // pred_fallthru
    _

</llo_original>
